<compile_context>
chip_gen: v7x
topology: tpu7x:2x2x1
jax: 0.10.0
libtpu: 0.0.40
codegen_flags: <defaults>
</compile_context>

<pallas_src>
from functools import partial

import jax
import jax.numpy as jnp
import numpy as np
from jax.experimental import pallas as pl
from jax.experimental.pallas import tpu as pltpu

EPS = 1e-5  # nn.InstanceNorm2d default eps


def adain_kernel(x_ref, gb_ref, o_ref, *, fuse_leaky_relu):
    # x_ref: (TR, HW)   gb_ref: (TR, 2) = [1+gamma, beta]   o_ref: (TR, HW)
    x = x_ref[...].astype(jnp.float32)                      # (TR, HW)
    inv_hw = 1.0 / x.shape[-1]

    # Two-pass instance-norm statistics along the lane (HW) axis.
    mean = jnp.sum(x, axis=-1, keepdims=True) * inv_hw      # (TR, 1)
    xc = x - mean
    var = jnp.sum(xc * xc, axis=-1, keepdims=True) * inv_hw # biased var (InstanceNorm)
    inv_std = jax.lax.rsqrt(var + EPS)

    scale = gb_ref[:, 0:1].astype(jnp.float32) * inv_std    # (1+gamma)/std
    beta = gb_ref[:, 1:2].astype(jnp.float32)
    y = xc * scale + beta                                   # == (1+gamma)*norm(x) + beta

    if fuse_leaky_relu:
        # StarGAN-v2 AdainResBlk applies LeakyReLU(0.2) right after norm1;
        # fusing it here removes a full extra HBM read+write in the caller.
        y = jnp.where(y > 0, y, 0.2 * y)

    o_ref[...] = y.astype(o_ref.dtype)


def _choose_row_tile(nc, hw, itemsize, max_block_bytes=2 << 20, min_steps=8):
    """Largest multiple-of-8 row tile that divides nc, stays under the block
    byte budget, and (when possible) leaves >= min_steps grid steps."""
    if nc % 8 != 0:
        return nc  # block shape must then equal the full array dim
    row_bytes = max(1, hw * itemsize)
    cap = max(8, (max_block_bytes // row_bytes) // 8 * 8)
    if nc // 8 >= min_steps:
        cap = min(cap, max(8, (nc // min_steps) // 8 * 8))
    tr = 8
    for t in range(8, min(nc, cap) + 1, 8):
        if nc % t == 0:
            tr = t
    return tr


@partial(jax.jit, static_argnames=("fuse_leaky_relu",))
def adain_forward(x_nchw, s, fc_w, fc_b, *, fuse_leaky_relu=False):
    """x_nchw: (N,C,H,W), s: (N,S), fc_w: (S,2C), fc_b: (2C,)."""
    N, C, H, W = x_nchw.shape
    HW = H * W
    NC = N * C

    # Style MLP hoisted out of the grid (single small matmul, default precision).
    h = jnp.dot(s, fc_w) + fc_b                              # (N, 2C)
    gamma = h[:, :C]
    beta = h[:, C:]
    # Pack (1+gamma, beta) into one (N*C, 2) tensor; row order matches x.reshape.
    gb = jnp.stack([1.0 + gamma, beta], axis=-1).reshape(NC, 2).astype(jnp.float32)

    # Lane-dense, sublane-full view: NCHW is contiguous so this is layout-free.
    x2 = x_nchw.reshape(NC, HW)

    TR = _choose_row_tile(NC, HW, x2.dtype.itemsize)
    grid = (NC // TR,)

    kernel = partial(adain_kernel, fuse_leaky_relu=fuse_leaky_relu)

    out = pl.pallas_call(
        kernel,
        out_shape=jax.ShapeDtypeStruct((NC, HW), x2.dtype),
        grid=grid,
        in_specs=[
            pl.BlockSpec((TR, HW), lambda i: (i, 0)),
            pl.BlockSpec((TR, 2), lambda i: (i, 0)),
        ],
        out_specs=pl.BlockSpec((TR, HW), lambda i: (i, 0)),
        compiler_params=pltpu.CompilerParams(
            dimension_semantics=("parallel",),
            vmem_limit_bytes=32 * 1024 * 1024,
        ),
    )(x2, gb)

    return out.reshape(N, C, H, W)


def reference_forward(x, s, fc_w, fc_b):
    """Pure-JAX mirror of the PyTorch AdaIN forward."""
    C = x.shape[1]
    h = jnp.dot(s, fc_w) + fc_b
    gamma = h[:, :C][:, :, None, None]
    beta = h[:, C:][:, :, None, None]
    mean = x.mean(axis=(2, 3), keepdims=True)
    var = ((x - mean) ** 2).mean(axis=(2, 3), keepdims=True)
    xn = (x - mean) / jnp.sqrt(var + EPS)
    return (1.0 + gamma) * xn + beta


if __name__ == "__main__":
    N, C, H, W, S = 2, 4, 16, 16, 64  # batch=2, num_features=4, 16x16, style_dim=64

    key = jax.random.PRNGKey(0)
    kx, ks, kw, kb = jax.random.split(key, 4)
    x = jax.random.normal(kx, (N, C, H, W), jnp.float32)     # NCHW like PyTorch
    s = jax.random.normal(ks, (N, S), jnp.float32)
    # nn.Linear(style_dim, 2*num_features), parameterized directly as (S, 2C) + (2C,)
    fc_w = 0.1 * jax.random.normal(kw, (S, 2 * C), jnp.float32)
    fc_b = 0.1 * jax.random.normal(kb, (2 * C,), jnp.float32)

    out = jax.block_until_ready(adain_forward(x, s, fc_w, fc_b))
    assert out.shape == (N, C, H, W), out.shape

    ref = jax.block_until_ready(reference_forward(x, s, fc_w, fc_b))
    np.testing.assert_allclose(np.asarray(out), np.asarray(ref), rtol=1e-3, atol=1e-3)

    print("KERNEL_OK")
</pallas_src>

<mosaic_0001>
module attributes {stable_mosaic.version = 11 : i64} {
  func.func @adain_kernel(%arg0: i32, %arg1: memref<8x256xf32, #tpu.memory_space<vmem>>, %arg2: memref<8x2xf32, #tpu.memory_space<vmem>>, %arg3: memref<8x256xf32, #tpu.memory_space<vmem>>) attributes {dimension_semantics = [#tpu.dimension_semantics<parallel>], iteration_bounds = array<i64: 1>, scalar_prefetch = 0 : i64, scratch_operands = 0 : i64, tpu.core_type = #tpu.core_type<tc>, window_params = [{transform_indices = @transform_0, window_bounds = array<i64: 8, 256>}, {transform_indices = @transform_1, window_bounds = array<i64: 8, 2>}, {transform_indices = @transform_2, window_bounds = array<i64: 8, 256>}]} {
    %c0 = arith.constant 0 : index
    %c0_0 = arith.constant 0 : index
    %0 = vector.load %arg1[%c0, %c0_0] : memref<8x256xf32, #tpu.memory_space<vmem>>, vector<8x256xf32>
    %cst = arith.constant dense<0.000000e+00> : vector<8xf32>
    %1 = vector.multi_reduction <add>, %0, %cst [1] : vector<8x256xf32> to vector<8xf32>
    %2 = vector.shape_cast %1 : vector<8xf32> to vector<8x1xf32>
    %cst_1 = arith.constant 3.906250e-03 : f32
    %3 = vector.broadcast %cst_1 : f32 to vector<8x1xf32>
    %4 = arith.mulf %2, %3 : vector<8x1xf32>
    %5 = vector.broadcast %4 : vector<8x1xf32> to vector<8x256xf32>
    %6 = arith.subf %0, %5 : vector<8x256xf32>
    %7 = arith.mulf %6, %6 : vector<8x256xf32>
    %cst_2 = arith.constant dense<0.000000e+00> : vector<8xf32>
    %8 = vector.multi_reduction <add>, %7, %cst_2 [1] : vector<8x256xf32> to vector<8xf32>
    %9 = vector.shape_cast %8 : vector<8xf32> to vector<8x1xf32>
    %cst_3 = arith.constant 3.906250e-03 : f32
    %10 = vector.broadcast %cst_3 : f32 to vector<8x1xf32>
    %11 = arith.mulf %9, %10 : vector<8x1xf32>
    %cst_4 = arith.constant 9.99999974E-6 : f32
    %12 = vector.broadcast %cst_4 : f32 to vector<8x1xf32>
    %13 = arith.addf %11, %12 : vector<8x1xf32>
    %14 = math.rsqrt %13 : vector<8x1xf32>
    %c0_5 = arith.constant 0 : index
    %c0_6 = arith.constant 0 : index
    %15 = vector.load %arg2[%c0_5, %c0_6] : memref<8x2xf32, #tpu.memory_space<vmem>>, vector<8x1xf32>
    %16 = arith.mulf %15, %14 : vector<8x1xf32>
    %c0_7 = arith.constant 0 : index
    %c1 = arith.constant 1 : index
    %17 = vector.load %arg2[%c0_7, %c1] : memref<8x2xf32, #tpu.memory_space<vmem>>, vector<8x1xf32>
    %18 = vector.broadcast %16 : vector<8x1xf32> to vector<8x256xf32>
    %19 = arith.mulf %6, %18 : vector<8x256xf32>
    %20 = vector.broadcast %17 : vector<8x1xf32> to vector<8x256xf32>
    %21 = arith.addf %19, %20 : vector<8x256xf32>
    %c0_8 = arith.constant 0 : index
    %c0_9 = arith.constant 0 : index
    %22 = vector.load %arg3[%c0_8, %c0_9] : memref<8x256xf32, #tpu.memory_space<vmem>>, vector<8x256xf32>
    tpu.vector_store %arg3[%c0_8, %c0_9], %21 {strides = array<i32>} : memref<8x256xf32, #tpu.memory_space<vmem>>, vector<8x256xf32>,
    return
  }
  func.func @transform_0(%arg0: i32) -> (i32, i32) {
    %c0_i32 = arith.constant 0 : i32
    %c0_i32_0 = arith.constant 0 : i32
    return %arg0, %c0_i32 : i32, i32
  }
  func.func @transform_1(%arg0: i32) -> (i32, i32) {
    %c0_i32 = arith.constant 0 : i32
    %c0_i32_0 = arith.constant 0 : i32
    return %arg0, %c0_i32 : i32, i32
  }
  func.func @transform_2(%arg0: i32) -> (i32, i32) {
    %c0_i32 = arith.constant 0 : i32
    %c0_i32_0 = arith.constant 0 : i32
    return %arg0, %c0_i32 : i32, i32
  }
}

</mosaic_0001>

<llo_original>
// kernel: adain_forward.1
$region0: #{adain_forward.1}
  #allocation0 [shape = 'u32[]', space=smem, size = 0x4, offset = 0x4, fixed_abs, tag = 'smem constant byte address 0x4 - core index']
  #allocation1 [shape = 'u32[144,128]{1,0:T(1,128)}', space=vmem, size = 0x12000, scoped, tag = 'internal scratch']
  %s0 = inlined_call_operand.vmem [shape: f32[8,256], index: 0, kind: input, shape index: {}]
  %s1 = inlined_call_operand.vmem [shape: f32[8,2], index: 1, kind: input, shape index: {}]
  %s2 = inlined_call_operand.vmem [shape: f32[8,256], index: 2, kind: output, shape index: {}]
  %s3 = sld [smem:[#allocation0]]
  $region18: #{adain_forward.1} parent=0
    _
  %s5 = ssub.s32 1, %s3
  %s6 = scalar_select 0, %s5, %s3
  // Predicated region
  $region2: #{adain_forward.1} parent=0 // pred_check
    _
  $region3: #{adain_forward.1} parent=0 // pred_check_branch
    %8 = sbr.rel (0) target = $region5
  $region4: #{adain_forward.1} parent=0 // pred_region
    _
  $region5: #{adain_forward.1} parent=0 // pred_fallthru
    _
  // Predicated region
  $region6: #{adain_forward.1} parent=0 // pred_check
    _
  $region7: #{adain_forward.1} parent=0 // pred_check_branch
    %10 = sbr.rel (0) target = $region9
  $region8: #{adain_forward.1} parent=0 // pred_region
    _
  $region9: #{adain_forward.1} parent=0 // pred_fallthru
    _
  %v11 = vld [vmem:[%s0] sm:$0xff]
  %v12 = vld [vmem:[%s0 + $0x8] sm:$0xff]
  %v13 = vadd.f32 %v11, %v12
  %14 = vadd.xlane.f32.xlu0 %v13
  %v15 = vpop.xlane.xlu0 %14
  %v16 = vmul.f32 %v15, 0.00390625
  %v17 = vsub.f32 %v11, %v16
  %v18 = vsub.f32 %v12, %v16
  %v19 = vmul.f32 %v17, %v17
  %v20 = vmul.f32 %v18, %v18
  %v21 = vadd.f32 %v19, %v20
  %22 = vadd.xlane.f32.xlu0 %v21
  %v23 = vpop.xlane.xlu0 %22
  %v24 = vmul.f32 %v23, 0.00390625
  %v25 = vadd.f32 %v24, 1e-05
  %v26 = vrsqrt.pop %v25
  %v27 = vld [vmem:[%s1] sm:$0xff]
  %v28 = vmul.f32 %v27, %v26
  %30 = vset.pattern.permute.xlu0 0
  %31 = vperm.xlu0 %30, %v28
  %v32 = vpop.permute.xlu0 %31
  %v34 = vmul.f32 %v17, %v32
  %v35 = vmul.f32 %v18, %v32
  %37 = vset.pattern.permute.xlu0 1
  %38 = vperm.xlu0 %37, %v27
  %v39 = vpop.permute.xlu0 %38
  %v41 = vadd.f32 %v34, %v39
  %v42 = vadd.f32 %v35, %v39
  %43 = vst [vmem:[%s2] sm:$0xff] %v41
  %44 = vst [vmem:[%s2 + $0x8] sm:$0xff] %v42
  // Predicated region
  $region10: #{adain_forward.1} parent=0 // pred_check
    _
  $region11: #{adain_forward.1} parent=0 // pred_check_branch
    %46 = sbr.rel (0) target = $region13
  $region12: #{adain_forward.1} parent=0 // pred_region
    _
  $region13: #{adain_forward.1} parent=0 // pred_fallthru
    _
  // Predicated region
  $region14: #{adain_forward.1} parent=0 // pred_check
    _
  $region15: #{adain_forward.1} parent=0 // pred_check_branch
    %48 = sbr.rel (0) target = $region17
  $region16: #{adain_forward.1} parent=0 // pred_region
    _
  $region17: #{adain_forward.1} parent=0 // pred_fallthru
    _

</llo_original>
